<compile_context>
chip_gen: v5e
topology: v5e:2x2
jax: 0.10.0
libtpu: 0.0.40
codegen_flags: <defaults>
</compile_context>

<pallas_src>
import jax
import jax.numpy as jnp
import numpy as np
from jax.experimental import pallas as pl
from jax.experimental.pallas import tpu as pltpu

# ---- compile-time tree configuration (small, synthetic) --------------------
NUM_INPUT = 16                      # num_input features
MAX_DEPTH = 2                       # tree depth (root at depth 0, leaves at 2)
NUM_NODES = 2 ** MAX_DEPTH - 1      # internal nodes, heap order (root=0)
NUM_LEAVES = 2 ** MAX_DEPTH
NUM_DEVICES = 8
LEAF_SIZE = NUM_DEVICES // NUM_LEAVES

# Packed parameter slab layout: one (8, 128) f32 VMEM tile.
PARAM_ROWS = 8
PARAM_LANES = 128
PROB_ROW = NUM_NODES                # row holding the flattened leaf table
LEAF_LANE = PARAM_LANES - 1         # output lane carrying the bitcast leaf idx

assert NUM_NODES + 1 <= PARAM_ROWS
assert NUM_INPUT + 1 <= PARAM_LANES
assert NUM_LEAVES * LEAF_SIZE <= LEAF_LANE   # prob lanes never collide w/ leaf lane


def _clustree_kernel(x_ref, params_ref, out_ref):
    x = x_ref[...]                                                   # (1, F) f32

    # Gate logits for every internal node: VPU broadcast-mul + lane reduce.
    # (Static sub-slices of the slab; no MXU pass, no in-kernel transpose.)
    w = params_ref[pl.ds(0, NUM_NODES), pl.ds(0, NUM_INPUT)]         # (N, F)
    b = params_ref[pl.ds(0, NUM_NODES), pl.ds(NUM_INPUT, 1)]         # (N, 1)
    logits = jnp.sum(w * x, axis=1, keepdims=True) + b               # (N, 1)
    vals = jax.nn.sigmoid(logits)                                    # (N, 1) EUP

    # Pull each node's gate value out to a scalar once (independent extracts),
    # then walk the tree with pure scalar compare/select work.
    # NOTE: fine for MAX_DEPTH<=3; for deeper trees vectorize the per-leaf
    # path products in one vreg instead of this O(2^level) select chain.
    v = [vals[i, 0] for i in range(NUM_NODES)]

    leaf = jnp.int32(0)          # path bits (L=0, R=1), MSB = root decision
    acc = jnp.float32(1.0)       # product of gate factors along the path
    for level in range(MAX_DEPTH):                 # static unroll (depth const)
        base = 2 ** level - 1                      # heap offset of this level
        cur = v[base]
        for j in range(1, 2 ** level):             # select this level's node
            cur = jnp.where(leaf == j, v[base + j], cur)
        go_right = cur >= 0.5
        acc = acc * jnp.where(go_right, cur, 1.0 - cur)
        leaf = 2 * leaf + go_right.astype(jnp.int32)

    # Scale the ENTIRE lane-major leaf table row by the path product (no
    # dynamic slice needed — host slices the chosen leaf's lanes), and pack
    # the leaf index (bitcast, not cast) into the last lane. One full-width
    # unmasked 128-lane store.
    prob_row = params_ref[pl.ds(PROB_ROW, 1), :]                     # (1, 128)
    scaled = acc * prob_row                                          # (1, 128)
    lane = jax.lax.broadcasted_iota(jnp.int32, (1, PARAM_LANES), 1)
    leaf_bits = pltpu.bitcast(jnp.broadcast_to(leaf, (1, PARAM_LANES)),
                              jnp.float32)
    out_ref[...] = jnp.where(lane == LEAF_LANE, leaf_bits, scaled)


def prepare_params(w, b, prob):
    """One-time packing of all tree parameters into a single (8,128) slab.

    Rows 0..NUM_NODES-1: lanes [0:F) = node weights, lane F = node bias.
    Row  NUM_NODES:      lanes [0:NUM_LEAVES*LEAF_SIZE) = flattened leaf table.
    """
    slab = jnp.zeros((PARAM_ROWS, PARAM_LANES), dtype=jnp.float32)
    slab = slab.at[:NUM_NODES, :NUM_INPUT].set(w.astype(jnp.float32))
    slab = slab.at[:NUM_NODES, NUM_INPUT].set(b.reshape(NUM_NODES).astype(jnp.float32))
    slab = slab.at[PROB_ROW, :NUM_LEAVES * LEAF_SIZE].set(
        prob.reshape(-1).astype(jnp.float32))
    return slab


@jax.jit
def clustree_forward(x, params_slab):
    """Pallas ClusTree forward.

    Returns one (1, 128) f32 row: lanes [leaf*LEAF_SIZE : (leaf+1)*LEAF_SIZE)
    hold acc * prob_dist[leaf]; lane LEAF_LANE holds the leaf index (bitcast
    int32). Decoded host-side.
    """
    x2 = x.reshape(1, NUM_INPUT).astype(jnp.float32)
    out = pl.pallas_call(
        _clustree_kernel,
        out_shape=jax.ShapeDtypeStruct((1, PARAM_LANES), jnp.float32),
        in_specs=[
            pl.BlockSpec(memory_space=pltpu.MemorySpace.VMEM),   # x
            pl.BlockSpec(memory_space=pltpu.MemorySpace.VMEM),   # packed params
        ],
        out_specs=pl.BlockSpec(memory_space=pltpu.MemorySpace.VMEM),
    )(x2, params_slab)
    return out


# ---- host-side glue (path string, device partitioning) ---------------------
def build_leaf_devices(devices, depth, max_depth):
    """Recursively partitions devices into leaves in tree construction order."""
    if depth == max_depth:
        return [devices]
    # TODO(synk): balance_kmeans_cluster uses sklearn KMeans on host; replaced
    # by a deterministic balanced half-split for this synthetic kernel.
    half = len(devices) // 2
    left, right = devices[:half], devices[half:]
    return (build_leaf_devices(left, depth + 1, max_depth)
            + build_leaf_devices(right, depth + 1, max_depth))


def leaf_to_path(leaf_idx, max_depth):
    bits = [(leaf_idx >> (max_depth - 1 - l)) & 1 for l in range(max_depth)]
    return "".join("R" if b else "L" for b in bits)


def reference_forward(x, w, b, prob):
    """Pure-JAX/Python reference mirroring the PyTorch recursion (no explore)."""
    vals = jax.device_get(jax.nn.sigmoid(w @ x + b))      # (N_nodes,)
    node, leaf, acc = 0, 0, 1.0
    for _ in range(MAX_DEPTH):
        v = float(vals[node])
        gr = 1 if v >= 0.5 else 0
        acc *= v if gr else (1.0 - v)
        node = 2 * node + 1 + gr
        leaf = 2 * leaf + gr
    return acc * jax.device_get(prob)[leaf], leaf


if __name__ == "__main__":
    key = jax.random.PRNGKey(0)
    kx, kw = jax.random.split(key)

    # Deterministic parameters matching the module's __init__ shapes:
    #  - each internal node: weights ~ N(0, 0.1), bias = 0
    #  - each leaf: prob_dist (nn.Parameter, init ones; perturbed here so the
    #    leaf-select path is actually exercised by the numeric check)
    x = jax.random.normal(kx, (NUM_INPUT,), dtype=jnp.float32)
    w = 0.1 * jax.random.normal(kw, (NUM_NODES, NUM_INPUT), dtype=jnp.float32)
    b = jnp.zeros((NUM_NODES,), dtype=jnp.float32)
    prob = (1.0 + 0.1 * jnp.arange(NUM_LEAVES * LEAF_SIZE, dtype=jnp.float32)
            ).reshape(NUM_LEAVES, LEAF_SIZE)

    # One-time parameter packing (NOT in the per-call hot path).
    params_slab = prepare_params(w, b, prob)
    params_slab = jax.block_until_ready(params_slab)

    # NOTE: exploration in the PyTorch forward uses np.random; here
    # should_explore=False so the forward path is deterministic.
    out = clustree_forward(x, params_slab)
    out = jax.block_until_ready(out)

    # Single device->host fetch of the single packed output row.
    out_h = np.asarray(jax.device_get(out))                       # (1, 128) f32
    leaf_idx = int(out_h[0, LEAF_LANE:LEAF_LANE + 1].view(np.int32)[0])
    out_prob_h = out_h[0, leaf_idx * LEAF_SIZE:(leaf_idx + 1) * LEAF_SIZE]

    # host-side outputs matching the module's (prob, path, devices) tuple
    devices = list(range(NUM_DEVICES))
    leaf_devices = build_leaf_devices(devices, 0, MAX_DEPTH)
    path = leaf_to_path(leaf_idx, MAX_DEPTH)
    reached_devices = leaf_devices[leaf_idx]

    # correctness check against a pure-JAX reference
    ref_prob, ref_leaf = reference_forward(x, w, b, prob)
    assert leaf_idx == ref_leaf, (leaf_idx, ref_leaf)
    assert np.allclose(out_prob_h, np.asarray(ref_prob), rtol=1e-5, atol=1e-6), (
        out_prob_h, ref_prob)
    assert len(path) == MAX_DEPTH and len(reached_devices) == LEAF_SIZE

    print("KERNEL_OK")
</pallas_src>

<mosaic_0001>
module attributes {stable_mosaic.version = 11 : i64} {
  func.func @_clustree_kernel(%arg0: memref<1x16xf32, #tpu.memory_space<vmem>>, %arg1: memref<8x128xf32, #tpu.memory_space<vmem>>, %arg2: memref<1x128xf32, #tpu.memory_space<vmem>>) attributes {dimension_semantics = [], scalar_prefetch = 0 : i64, scratch_operands = 0 : i64, tpu.core_type = #tpu.core_type<tc>} {
    %c0 = arith.constant 0 : index
    %c0_0 = arith.constant 0 : index
    %0 = vector.load %arg0[%c0, %c0_0] : memref<1x16xf32, #tpu.memory_space<vmem>>, vector<1x16xf32>
    %c0_1 = arith.constant 0 : index
    %c0_2 = arith.constant 0 : index
    %1 = vector.load %arg1[%c0_1, %c0_2] : memref<8x128xf32, #tpu.memory_space<vmem>>, vector<3x16xf32>
    %c0_3 = arith.constant 0 : index
    %c16 = arith.constant 16 : index
    %2 = vector.load %arg1[%c0_3, %c16] : memref<8x128xf32, #tpu.memory_space<vmem>>, vector<3x1xf32>
    %3 = vector.broadcast %0 : vector<1x16xf32> to vector<3x16xf32>
    %4 = arith.mulf %1, %3 : vector<3x16xf32>
    %cst = arith.constant dense<0.000000e+00> : vector<3xf32>
    %5 = vector.multi_reduction <add>, %4, %cst [1] : vector<3x16xf32> to vector<3xf32>
    %6 = vector.shape_cast %5 : vector<3xf32> to vector<3x1xf32>
    %7 = arith.addf %6, %2 : vector<3x1xf32>
    %8 = arith.negf %7 : vector<3x1xf32>
    %9 = math.exp %8 : vector<3x1xf32>
    %cst_4 = arith.constant 1.000000e+00 : f32
    %10 = vector.broadcast %cst_4 : f32 to vector<3x1xf32>
    %11 = arith.addf %10, %9 : vector<3x1xf32>
    %12 = arith.divf %10, %11 : vector<3x1xf32>
    %13 = vector.extract_strided_slice %12 {offsets = [0, 0], sizes = [1, 1], strides = [1, 1]} : vector<3x1xf32> to vector<1x1xf32>
    %14 = vector.extract %13[0, 0] : f32 from vector<1x1xf32>
    %15 = vector.extract_strided_slice %12 {offsets = [1, 0], sizes = [1, 1], strides = [1, 1]} : vector<3x1xf32> to vector<1x1xf32>
    %16 = vector.extract %15[0, 0] : f32 from vector<1x1xf32>
    %17 = vector.extract_strided_slice %12 {offsets = [2, 0], sizes = [1, 1], strides = [1, 1]} : vector<3x1xf32> to vector<1x1xf32>
    %18 = vector.extract %17[0, 0] : f32 from vector<1x1xf32>
    %cst_5 = arith.constant 5.000000e-01 : f32
    %19 = arith.cmpf oge, %14, %cst_5 : f32
    %cst_6 = arith.constant 1.000000e+00 : f32
    %20 = arith.subf %cst_6, %14 : f32
    %21 = arith.select %19, %14, %20 : f32
    %cst_7 = arith.constant 1.000000e+00 : f32
    %22 = arith.mulf %cst_7, %21 : f32
    %c2_i32 = arith.constant 2 : i32
    %c0_i32 = arith.constant 0 : i32
    %23 = arith.muli %c2_i32, %c0_i32 : i32
    %24 = arith.extui %19 : i1 to i32
    %25 = arith.addi %23, %24 : i32
    %c1_i32 = arith.constant 1 : i32
    %26 = arith.cmpi eq, %25, %c1_i32 : i32
    %27 = arith.select %26, %18, %16 : f32
    %cst_8 = arith.constant 5.000000e-01 : f32
    %28 = arith.cmpf oge, %27, %cst_8 : f32
    %cst_9 = arith.constant 1.000000e+00 : f32
    %29 = arith.subf %cst_9, %27 : f32
    %30 = arith.select %28, %27, %29 : f32
    %31 = arith.mulf %22, %30 : f32
    %c2_i32_10 = arith.constant 2 : i32
    %32 = arith.muli %c2_i32_10, %25 : i32
    %33 = arith.extui %28 : i1 to i32
    %34 = arith.addi %32, %33 : i32
    %c3 = arith.constant 3 : index
    %c0_11 = arith.constant 0 : index
    %35 = vector.load %arg1[%c3, %c0_11] : memref<8x128xf32, #tpu.memory_space<vmem>>, vector<1x128xf32>
    %36 = vector.broadcast %31 : f32 to vector<1x128xf32>
    %37 = arith.mulf %36, %35 : vector<1x128xf32>
    %38 = tpu.iota {dimensions = array<i32: 1>} : vector<1x128xi32>
    %39 = vector.broadcast %34 : i32 to vector<1x128xi32>
    %40 = tpu.bitcast %39 : vector<1x128xi32> -> vector<1x128xf32>
    %c127_i32 = arith.constant 127 : i32
    %41 = vector.broadcast %c127_i32 : i32 to vector<1x128xi32>
    %42 = arith.cmpi eq, %38, %41 : vector<1x128xi32>
    %43 = arith.select %42, %40, %37 : vector<1x128xi1>, vector<1x128xf32>
    %c0_12 = arith.constant 0 : index
    %c0_13 = arith.constant 0 : index
    %44 = vector.load %arg2[%c0_12, %c0_13] : memref<1x128xf32, #tpu.memory_space<vmem>>, vector<1x128xf32>
    tpu.vector_store %arg2[%c0_12, %c0_13], %43 {strides = array<i32>} : memref<1x128xf32, #tpu.memory_space<vmem>>, vector<1x128xf32>,
    return
  }
}

</mosaic_0001>

<llo_original>
// kernel: clustree_forward.1
$region0: #{clustree_forward.1}
  #allocation0 [shape = 'u32[]', space=smem, size = 0x4, offset = 0x4, fixed_abs, tag = 'smem constant byte address 0x4 - core index']
  #allocation1 [shape = 'u32[72,128]{1,0:T(1,128)}', space=vmem, size = 0x9000, scoped, tag = 'internal scratch']
  %s0 = inlined_call_operand.hbm [shape: f32[1,16], index: 0, kind: input, shape index: {}]
  %s1 = inlined_call_operand.hbm [shape: f32[8,128], index: 1, kind: input, shape index: {}]
  %s2 = inlined_call_operand.hbm [shape: f32[1,128], index: 2, kind: output, shape index: {}]
  %s3 = sld [smem:[#allocation0]]
  $region26: #{clustree_forward.1} parent=0
    _
  %s5 = ssub.s32 1, %s3
  %s6 = scalar_select 0, %s5, %s3
  $region1: #{clustree_forward.1} parent=0
    #allocation2 [shape = 'u8[512]{0}', space=vmem, size = 0x400, scoped, tag = 'input window, operand 0, single buffered']
    #allocation3 [shape = 's32[1]{0}', space=sflag, size = 0x4, scoped, tag = 'scoped memory for clustree_forward.1']
    #allocation4 [shape = 's32[1]{0}', space=sflag, size = 0x4, scoped, tag = 'scoped memory for clustree_forward.1']
    #allocation5 [shape = 'u8[4096]{0}', space=vmem, size = 0x1000, scoped, tag = 'input window, operand 1, single buffered']
    #allocation6 [shape = 's32[1]{0}', space=sflag, size = 0x4, scoped, tag = 'scoped memory for clustree_forward.1']
    #allocation7 [shape = 'u8[512]{0}', space=vmem, size = 0x400, scoped, tag = 'output window, operand 0, single buffered']
    %7 = vsyncpa [#allocation3], 0
    %8 = vsyncpa [#allocation6], 0
    %9 = vsyncpa [#allocation4], 0
    // Predicated region
    $region2: #{clustree_forward.1} parent=1 // pred_check
      _
    $region3: #{clustree_forward.1} parent=1 // pred_check_branch
      %11 = sbr.rel (0) target = $region5
    $region4: #{clustree_forward.1} parent=1 // pred_region
      %13 = vsyncadd [#allocation3], 0
      %s15 = sshll.u32 %s0, 4
      %s16 = int_to_ptr.hbm [resolvable:$true] %s15
      %s17 = sshll.u32 [#allocation2], 4
      %s18 = int_to_ptr.vmem [resolvable:$true] %s17
      %20 = dma.hbm_to_vmem [thread:$0]  %s16, 16, %s18, [#allocation3]
    $region5: #{clustree_forward.1} parent=1 // pred_fallthru
      _
    // Predicated region
    $region6: #{clustree_forward.1} parent=1 // pred_check
      _
    $region7: #{clustree_forward.1} parent=1 // pred_check_branch
      %22 = sbr.rel (0) target = $region9
    $region8: #{clustree_forward.1} parent=1 // pred_region
      %24 = vsyncadd [#allocation6], 0
      %s26 = sshll.u32 %s1, 4
      %s27 = int_to_ptr.hbm [resolvable:$true] %s26
      %s28 = sshll.u32 [#allocation5], 4
      %s29 = int_to_ptr.vmem [resolvable:$true] %s28
      %31 = dma.hbm_to_vmem [thread:$0]  %s27, 128, %s29, [#allocation6]
    $region9: #{clustree_forward.1} parent=1 // pred_fallthru
      _
    // Predicated region
    $region10: #{clustree_forward.1} parent=1 // pred_check
      _
    $region11: #{clustree_forward.1} parent=1 // pred_check_branch
      %33 = sbr.rel (0) target = $region13
    $region12: #{clustree_forward.1} parent=1 // pred_region
      %35 = dma.done [#allocation3], 16
    $region13: #{clustree_forward.1} parent=1 // pred_fallthru
      _
    // Predicated region
    $region14: #{clustree_forward.1} parent=1 // pred_check
      _
    $region15: #{clustree_forward.1} parent=1 // pred_check_branch
      %37 = sbr.rel (0) target = $region17
    $region16: #{clustree_forward.1} parent=1 // pred_region
      %39 = dma.done [#allocation6], 128
    $region17: #{clustree_forward.1} parent=1 // pred_fallthru
      _
    %v40 = vld [vmem:[#allocation2] sm:$0x1]
    %v41 = vld [vmem:[#allocation5] sm:$0x7]
    %v43 = vperm.slane %v40, 0
    %v45 = vmul.f32 %v41, %v43
    %vm46 = vcmask 124928
    %v47 = vsel %vm46, %v45, 0.0
    %48 = vadd.xlane.f32.xlu0 %v47
    %v49 = vpop.xlane.xlu0 %48
    %v50 = vadd.f32 %v49, %v41
    %v51 = vxor.u32 %v50, 2147483648
    %v52 = vmul.f32 %v51, 1.442695
    %v53 = vpow.pop %v52
    %v54 = vadd.f32 %v53, 1.0
    %v55 = vrcp.pop %v54
    %v56 = vmul.f32 %v54, %v55
    %v57 = vsub.f32 1.0, %v56
    %v58 = vmul.f32 %v55, %v57
    %v59 = vadd.f32 %v55, %v58
    %vm60 = vweird.f32 %v54
    %vm61 = vweird.f32 %v55
    %vm62 = vmor %vm60, %vm61
    %v63 = vsel %vm62, %v55, %v59
    %v64 = vand.u32 2147483647, %v54
    %vm65 = vcmp.eq.f32.partialorder %v64, 8.507059e+37
    %v66 = vand.u32 %v54, 2147483648
    %v67 = vor.u32 1.1754944e-38, %v66
    %v68 = vsel %vm65, %v67, %v63
    %v69 = vmul.f32 1.0, %v68
    %71 = vrot.lane.b32.xlu0 %v69, 112
    %v72 = vpop.permute.xlu0 %71
    %s74 = vtos %v72
    %v75 = vrot.slane %v72, 1
    %s76 = vtos %v75
    %v77 = vrot.slane %v72, 2
    %s78 = vtos %v77
    %p79 = scmp.ge.f32.partialorder %s74, 0.5
    %s80 = ssub.f32 1.0, %s74
    %s81 = scalar_select %p79, %s74, %s80
    %s82 = scalar_select %p79, 1, 0
    %p83 = scmp.eq.s32.totalorder %s82, 1
    %s84 = scalar_select %p83, %s78, %s76
    %p85 = scmp.ge.f32.partialorder %s84, 0.5
    %s86 = ssub.f32 1.0, %s84
    %s87 = scalar_select %p85, %s84, %s86
    %s88 = smul.f32 %s81, %s87
    %s89 = smul.u32 %s82, 2
    %s90 = scalar_select %p85, 1, 0
    %s91 = sadd.s32 %s89, %s90
    %v92 = vld [vmem:[#allocation5 + $0x3] sm:$0x1]
    %v93 = vstv %s88
    %v94 = vmul.f32 %v93, %v92
    %v95 = vlaneseq
    %v96 = vand.u32 %v95, 127
    %v97 = vstv %s91
    %vm99 = vcmp.eq.s32.totalorder %v96, 127
    %v100 = vsel %vm99, %v97, %v94
    %101 = vst [vmem:[#allocation7] sm:$0x1] %v100
    // Predicated region
    $region18: #{clustree_forward.1} parent=1 // pred_check
      _
    $region19: #{clustree_forward.1} parent=1 // pred_check_branch
      %103 = sbr.rel (0) target = $region21
    $region20: #{clustree_forward.1} parent=1 // pred_region
      %105 = vsyncadd [#allocation4], 0
      %s107 = sshll.u32 [#allocation7], 4
      %s108 = int_to_ptr.vmem [resolvable:$true] %s107
      %s109 = sshll.u32 %s2, 4
      %s110 = int_to_ptr.hbm [resolvable:$true] %s109
      %112 = dma.vmem_to_hbm [thread:$0]  %s108, 16, %s110, [#allocation4]
    $region21: #{clustree_forward.1} parent=1 // pred_fallthru
      _
    // Predicated region
    $region22: #{clustree_forward.1} parent=1 // pred_check
      _
    $region23: #{clustree_forward.1} parent=1 // pred_check_branch
      %114 = sbr.rel (0) target = $region25
    $region24: #{clustree_forward.1} parent=1 // pred_region
      %116 = dma.done [#allocation4], 16
    $region25: #{clustree_forward.1} parent=1 // pred_fallthru
      _
    %117 = vsyncpa [#allocation3], 1
    %118 = vsyncpa [#allocation6], 1
    %119 = vsyncpa [#allocation4], 1

</llo_original>
